<compile_context>
chip_gen: v7x
topology: tpu7x:2x2x1
jax: 0.10.0
libtpu: 0.0.40
codegen_flags: <defaults>
</compile_context>

<pallas_src>
import functools

import jax
import jax.numpy as jnp
from jax.experimental import pallas as pl
from jax.experimental.pallas import tpu as pltpu

LANES = 128
SUBLANES = 8
MAX_BLOCK_ROWS = 4096                 # (4096, 128) f32 block = 2 MiB per operand buffer
VMEM_LIMIT_BYTES = 32 * 1024 * 1024   # safe on v5e/v6e/v7x; fused case uses ~24 MiB


def _num_core_splits(n_blocks):
    """Split the reduction across TensorCores only on multi-TC chips (v7x+)
    and only when each core gets a pipeline with a steady state (>= 2 blocks)."""
    if n_blocks < 4:
        return 1
    try:
        kind = jax.devices()[0].device_kind.lower()
    except Exception:
        return 1
    return 2 if ("v7" in kind or "7x" in kind) else 1


def _flat_main_and_tail(x):
    """Flatten; return the 128-divisible prefix as a (rows, 128) view plus the
    <=127-element tail.  No padded full-array copy is materialized."""
    x = x.reshape(-1)
    n_main = (x.shape[0] // LANES) * LANES
    main = x[:n_main].reshape(-1, LANES)
    tail = x[n_main:]
    return main, tail


def _prep(x, y, m):
    """Return ((x2, y2, m2) main views, tail contribution or None)."""
    if not (x.shape == y.shape == m.shape):
        x, y, m = jnp.broadcast_arrays(x, y, m)
    xm, xt = _flat_main_and_tail(x)
    ym, yt = _flat_main_and_tail(y)
    mm, mt = _flat_main_and_tail(m)
    tail = None
    if xt.shape[0]:
        tail = jnp.sum(xt.astype(jnp.float32) * yt.astype(jnp.float32)
                       * mt.astype(jnp.float32))
    return (xm, ym, mm), tail


def _product_sum_kernel(*refs, num_triples, block_rows, total_rows,
                        inner_steps, needs_mask):
    in_refs = refs[:3 * num_triples]
    out_refs = refs[3 * num_triples:4 * num_triples]
    acc_refs = refs[4 * num_triples:]

    c = pl.program_id(0)   # core-split index ("parallel")
    j = pl.program_id(1)   # row-block index within this split ("arbitrary")

    @pl.when(j == 0)
    def _():
        for acc in acc_refs:
            acc[...] = jnp.zeros_like(acc)

    if needs_mask:
        # Rows this step is NOT responsible for: ragged last block and
        # over-coverage steps whose block index was clamped in index_map.
        base_row = (c * inner_steps + j) * block_rows
        row_ids = base_row + jax.lax.broadcasted_iota(
            jnp.int32, (block_rows, LANES), 0)
        keep = row_ids < total_rows

    for t in range(num_triples):
        x_ref, y_ref, m_ref = in_refs[3 * t:3 * t + 3]
        prod = (x_ref[...].astype(jnp.float32)
                * y_ref[...].astype(jnp.float32)
                * m_ref[...].astype(jnp.float32))
        if needs_mask:
            # Select (not multiply) so garbage bytes in padded / over-coverage
            # blocks cannot propagate NaN/Inf.
            prod = jnp.where(keep, prod, 0.0)
        if block_rows % SUBLANES == 0:
            # One-vreg accumulator: fold sublane groups with pure VALU adds.
            acc_refs[t][...] += prod.reshape(
                block_rows // SUBLANES, SUBLANES, LANES).sum(axis=0)
        else:
            # Tiny single-block fallback (rows not a multiple of 8).
            acc_refs[t][...] += jnp.sum(prod, axis=0, keepdims=True)

    @pl.when(j == inner_steps - 1)
    def _():
        for t in range(num_triples):
            out_refs[t][...] = acc_refs[t][...][None]


def _product_sums(triples, *, max_block_rows=MAX_BLOCK_ROWS, splits=None):
    """sum(x * y * m) (f32) for each (x2, y2, m2) triple; all triples must share
    the same (rows, 128) main view so a single pallas_call streams them all."""
    rows = triples[0][0].shape[0]
    num_triples = len(triples)

    block_rows = min(max_block_rows, rows)
    n_blocks = pl.cdiv(rows, block_rows)
    if splits is None:
        splits = _num_core_splits(n_blocks)
    inner = pl.cdiv(n_blocks, splits)
    needs_mask = (splits * inner * block_rows) != rows
    acc_rows = SUBLANES if block_rows % SUBLANES == 0 else 1

    def row_map(c, j):
        # Clamp so fully-masked over-coverage steps stay in bounds.
        return (jnp.minimum(c * inner + j, n_blocks - 1), 0)

    in_spec = pl.BlockSpec((block_rows, LANES), row_map)
    out_spec = pl.BlockSpec((1, acc_rows, LANES), lambda c, j: (c, 0, 0))

    kernel = functools.partial(
        _product_sum_kernel,
        num_triples=num_triples,
        block_rows=block_rows,
        total_rows=rows,
        inner_steps=inner,
        needs_mask=needs_mask,
    )

    operands = []
    for (x2, y2, m2) in triples:
        operands += [x2, y2, m2]

    outs = pl.pallas_call(
        kernel,
        out_shape=tuple(
            jax.ShapeDtypeStruct((splits, acc_rows, LANES), jnp.float32)
            for _ in range(num_triples)),
        grid_spec=pltpu.PrefetchScalarGridSpec(
            num_scalar_prefetch=0,
            grid=(splits, inner),
            in_specs=[in_spec] * (3 * num_triples),
            out_specs=[out_spec] * num_triples,
            scratch_shapes=[pltpu.VMEM((acc_rows, LANES), jnp.float32)
                            for _ in range(num_triples)],
        ),
        compiler_params=pltpu.CompilerParams(
            dimension_semantics=("parallel", "arbitrary"),
            vmem_limit_bytes=VMEM_LIMIT_BYTES),
    )(*operands)

    if not isinstance(outs, (tuple, list)):
        outs = (outs,)
    return [jnp.sum(o) for o in outs]


def multi_am_maximization_loss(attn_alpha, attr_mask=None, norm2_mask=None, *args):
    """JAX/Pallas equivalent of MultiAMMaximizationLoss.forward.  Returns f32 scalar."""
    if attr_mask is None:
        raise ValueError("attr_mask must be provided (matches the PyTorch contract).")

    am_main, am_tail = _prep(args[0], args[1], attr_mask)
    am_rows = am_main[0].shape[0]

    if norm2_mask is None:
        am = jnp.float32(0.0)
        if am_rows > 0:
            am = am + _product_sums([am_main])[0]
        if am_tail is not None:
            am = am + am_tail
        return am

    n2_main, n2_tail = _prep(args[2], args[3], norm2_mask)
    n2_rows = n2_main[0].shape[0]

    am = jnp.float32(0.0)
    n2 = jnp.float32(0.0)
    if am_rows > 0 and am_rows == n2_rows:
        # Fused: both reductions share one pallas_call / one HBM pipeline.
        am_k, n2_k = _product_sums([am_main, n2_main])
        am = am + am_k
        n2 = n2 + n2_k
    else:
        if am_rows > 0:
            am = am + _product_sums([am_main])[0]
        if n2_rows > 0:
            n2 = n2 + _product_sums([n2_main])[0]
    if am_tail is not None:
        am = am + am_tail
    if n2_tail is not None:
        n2 = n2 + n2_tail

    alpha = jnp.asarray(attn_alpha, jnp.float32)
    return am + n2 * alpha


if __name__ == "__main__":
    key = jax.random.PRNGKey(0)
    ks = jax.random.split(key, 6)

    shape = (2, 4, 16, 16)  # B, C, H, W (NCHW as in the PyTorch usage)
    attr_mask = (jax.random.uniform(ks[0], shape) > 0.5).astype(jnp.float32)
    norm2_mask = (jax.random.uniform(ks[1], shape) > 0.5).astype(jnp.float32)
    arg0 = jax.random.normal(ks[2], shape, jnp.float32)
    arg1 = jax.random.normal(ks[3], shape, jnp.float32)
    arg2 = jax.random.normal(ks[4], shape, jnp.float32)
    arg3 = jax.random.normal(ks[5], shape, jnp.float32)
    attn_alpha = 0.5

    # Kernel result (fused am + norm2 branch).
    loss = multi_am_maximization_loss(attn_alpha, attr_mask, norm2_mask,
                                      arg0, arg1, arg2, arg3)
    loss = jax.block_until_ready(loss)

    # Kernel result (norm2_mask is None branch).
    loss_am_only = multi_am_maximization_loss(attn_alpha, attr_mask, None,
                                              arg0, arg1)
    loss_am_only = jax.block_until_ready(loss_am_only)

    # Pure-JAX reference check.
    ref_am = jnp.sum(arg0 * arg1 * attr_mask)
    ref_n2 = jnp.sum(arg2 * arg3 * norm2_mask)
    ref_full = ref_am + ref_n2 * attn_alpha
    assert jnp.allclose(loss, ref_full, rtol=1e-5, atol=1e-5)
    assert jnp.allclose(loss_am_only, ref_am, rtol=1e-5, atol=1e-5)

    # Narrow-dtype masks (bf16 0/1 masks are exact); exercises in-kernel upcast.
    loss_bf16_mask = multi_am_maximization_loss(
        attn_alpha, attr_mask.astype(jnp.bfloat16),
        norm2_mask.astype(jnp.bfloat16), arg0, arg1, arg2, arg3)
    loss_bf16_mask = jax.block_until_ready(loss_bf16_mask)
    assert jnp.allclose(loss_bf16_mask, ref_full, rtol=1e-5, atol=1e-5)

    # Sub-128-element input (kernel skipped, pure tail path).
    odd_shape = (3, 5, 7)  # 105 elements
    ka, kb, km = jax.random.split(jax.random.PRNGKey(1), 3)
    oa = jax.random.normal(ka, odd_shape, jnp.float32)
    ob = jax.random.normal(kb, odd_shape, jnp.float32)
    om = (jax.random.uniform(km, odd_shape) > 0.5).astype(jnp.float32)
    odd = jax.block_until_ready(multi_am_maximization_loss(attn_alpha, om, None, oa, ob))
    assert jnp.allclose(odd, jnp.sum(oa * ob * om), rtol=1e-5, atol=1e-5)

    # Mixed main + tail (300 elements = 2 full rows + 44 tail; also exercises
    # the non-multiple-of-8 single-block accumulator fallback).
    mshape = (2, 3, 50)
    kc, kd, ke = jax.random.split(jax.random.PRNGKey(3), 3)
    ma = jax.random.normal(kc, mshape, jnp.float32)
    mb = jax.random.normal(kd, mshape, jnp.float32)
    mc = (jax.random.uniform(ke, mshape) > 0.5).astype(jnp.float32)
    mixed = jax.block_until_ready(
        multi_am_maximization_loss(attn_alpha, mc, None, ma, mb))
    assert jnp.allclose(mixed, jnp.sum(ma * mb * mc), rtol=1e-5, atol=1e-5)

    # Multi-block + ragged-row-mask + forced 2-way split (clamped over-coverage)
    # exercised with a small block override so it runs with tiny data on any chip.
    big_shape = (4, 5, 128)  # 2560 elements -> 20 rows of 128
    kf, kg, kh = jax.random.split(jax.random.PRNGKey(2), 3)
    bx = jax.random.normal(kf, big_shape, jnp.float32)
    by = jax.random.normal(kg, big_shape, jnp.float32)
    bm = (jax.random.uniform(kh, big_shape) > 0.5).astype(jnp.float32)
    (bxm, bym, bmm), btail = _prep(bx, by, bm)
    assert btail is None
    forced = _product_sums([(bxm, bym, bmm)], max_block_rows=8, splits=2)[0]
    forced = jax.block_until_ready(forced)
    assert jnp.allclose(forced, jnp.sum(bx * by * bm), rtol=1e-5, atol=1e-4)

    print("KERNEL_OK")
</pallas_src>

<mosaic_0001>
module attributes {stable_mosaic.version = 11 : i64} {
  func.func @_product_sum_kernel(%arg0: i32, %arg1: i32, %arg2: memref<16x128xf32, #tpu.memory_space<vmem>>, %arg3: memref<16x128xf32, #tpu.memory_space<vmem>>, %arg4: memref<16x128xf32, #tpu.memory_space<vmem>>, %arg5: memref<16x128xf32, #tpu.memory_space<vmem>>, %arg6: memref<16x128xf32, #tpu.memory_space<vmem>>, %arg7: memref<16x128xf32, #tpu.memory_space<vmem>>, %arg8: memref<1x8x128xf32, #tpu.memory_space<vmem>>, %arg9: memref<1x8x128xf32, #tpu.memory_space<vmem>>, %arg10: memref<8x128xf32, #tpu.memory_space<vmem>>, %arg11: memref<8x128xf32, #tpu.memory_space<vmem>>) attributes {dimension_semantics = [#tpu.dimension_semantics<parallel>, #tpu.dimension_semantics<arbitrary>], iteration_bounds = array<i64: 1, 1>, scalar_prefetch = 0 : i64, scratch_operands = 2 : i64, tpu.core_type = #tpu.core_type<tc>, window_params = [{transform_indices = @transform_0, window_bounds = array<i64: 16, 128>}, {transform_indices = @transform_1, window_bounds = array<i64: 16, 128>}, {transform_indices = @transform_2, window_bounds = array<i64: 16, 128>}, {transform_indices = @transform_3, window_bounds = array<i64: 16, 128>}, {transform_indices = @transform_4, window_bounds = array<i64: 16, 128>}, {transform_indices = @transform_5, window_bounds = array<i64: 16, 128>}, {transform_indices = @transform_6, window_bounds = array<i64: 1, 8, 128>}, {transform_indices = @transform_7, window_bounds = array<i64: 1, 8, 128>}]} {
    %c0_i32 = arith.constant 0 : i32
    %0 = arith.cmpi eq, %arg1, %c0_i32 : i32
    %1 = arith.extui %0 : i1 to i32
    %c0_i32_0 = arith.constant 0 : i32
    %2 = arith.cmpi ne, %1, %c0_i32_0 : i32
    scf.if %2 {
      %cst_23 = arith.constant 0.000000e+00 : f32
      %26 = vector.broadcast %cst_23 : f32 to vector<8x128xf32>
      %c0_24 = arith.constant 0 : index
      %c0_25 = arith.constant 0 : index
      %27 = vector.load %arg10[%c0_24, %c0_25] : memref<8x128xf32, #tpu.memory_space<vmem>>, vector<8x128xf32>
      tpu.vector_store %arg10[%c0_24, %c0_25], %26 {strides = array<i32>} : memref<8x128xf32, #tpu.memory_space<vmem>>, vector<8x128xf32>,
      %cst_26 = arith.constant 0.000000e+00 : f32
      %28 = vector.broadcast %cst_26 : f32 to vector<8x128xf32>
      %c0_27 = arith.constant 0 : index
      %c0_28 = arith.constant 0 : index
      %29 = vector.load %arg11[%c0_27, %c0_28] : memref<8x128xf32, #tpu.memory_space<vmem>>, vector<8x128xf32>
      tpu.vector_store %arg11[%c0_27, %c0_28], %28 {strides = array<i32>} : memref<8x128xf32, #tpu.memory_space<vmem>>, vector<8x128xf32>,
    } else {
    }
    %c0 = arith.constant 0 : index
    %c0_1 = arith.constant 0 : index
    %3 = vector.load %arg2[%c0, %c0_1] : memref<16x128xf32, #tpu.memory_space<vmem>>, vector<16x128xf32>
    %c0_2 = arith.constant 0 : index
    %c0_3 = arith.constant 0 : index
    %4 = vector.load %arg3[%c0_2, %c0_3] : memref<16x128xf32, #tpu.memory_space<vmem>>, vector<16x128xf32>
    %5 = arith.mulf %3, %4 : vector<16x128xf32>
    %c0_4 = arith.constant 0 : index
    %c0_5 = arith.constant 0 : index
    %6 = vector.load %arg4[%c0_4, %c0_5] : memref<16x128xf32, #tpu.memory_space<vmem>>, vector<16x128xf32>
    %7 = arith.mulf %5, %6 : vector<16x128xf32>
    %c0_6 = arith.constant 0 : index
    %c0_7 = arith.constant 0 : index
    %8 = vector.load %arg10[%c0_6, %c0_7] : memref<8x128xf32, #tpu.memory_space<vmem>>, vector<8x128xf32>
    %9 = vector.shape_cast %7 : vector<16x128xf32> to vector<2x8x128xf32>
    %cst = arith.constant dense<0.000000e+00> : vector<8x128xf32>
    %10 = vector.multi_reduction <add>, %9, %cst [0] : vector<2x8x128xf32> to vector<8x128xf32>
    %11 = arith.addf %8, %10 : vector<8x128xf32>
    %c0_8 = arith.constant 0 : index
    %c0_9 = arith.constant 0 : index
    %12 = vector.load %arg10[%c0_8, %c0_9] : memref<8x128xf32, #tpu.memory_space<vmem>>, vector<8x128xf32>
    tpu.vector_store %arg10[%c0_8, %c0_9], %11 {strides = array<i32>} : memref<8x128xf32, #tpu.memory_space<vmem>>, vector<8x128xf32>,
    %c0_10 = arith.constant 0 : index
    %c0_11 = arith.constant 0 : index
    %13 = vector.load %arg5[%c0_10, %c0_11] : memref<16x128xf32, #tpu.memory_space<vmem>>, vector<16x128xf32>
    %c0_12 = arith.constant 0 : index
    %c0_13 = arith.constant 0 : index
    %14 = vector.load %arg6[%c0_12, %c0_13] : memref<16x128xf32, #tpu.memory_space<vmem>>, vector<16x128xf32>
    %15 = arith.mulf %13, %14 : vector<16x128xf32>
    %c0_14 = arith.constant 0 : index
    %c0_15 = arith.constant 0 : index
    %16 = vector.load %arg7[%c0_14, %c0_15] : memref<16x128xf32, #tpu.memory_space<vmem>>, vector<16x128xf32>
    %17 = arith.mulf %15, %16 : vector<16x128xf32>
    %c0_16 = arith.constant 0 : index
    %c0_17 = arith.constant 0 : index
    %18 = vector.load %arg11[%c0_16, %c0_17] : memref<8x128xf32, #tpu.memory_space<vmem>>, vector<8x128xf32>
    %19 = vector.shape_cast %17 : vector<16x128xf32> to vector<2x8x128xf32>
    %cst_18 = arith.constant dense<0.000000e+00> : vector<8x128xf32>
    %20 = vector.multi_reduction <add>, %19, %cst_18 [0] : vector<2x8x128xf32> to vector<8x128xf32>
    %21 = arith.addf %18, %20 : vector<8x128xf32>
    %c0_19 = arith.constant 0 : index
    %c0_20 = arith.constant 0 : index
    %22 = vector.load %arg11[%c0_19, %c0_20] : memref<8x128xf32, #tpu.memory_space<vmem>>, vector<8x128xf32>
    tpu.vector_store %arg11[%c0_19, %c0_20], %21 {strides = array<i32>} : memref<8x128xf32, #tpu.memory_space<vmem>>, vector<8x128xf32>,
    %c0_i32_21 = arith.constant 0 : i32
    %23 = arith.cmpi eq, %arg1, %c0_i32_21 : i32
    %24 = arith.extui %23 : i1 to i32
    %c0_i32_22 = arith.constant 0 : i32
    %25 = arith.cmpi ne, %24, %c0_i32_22 : i32
    scf.if %25 {
      %c0_23 = arith.constant 0 : index
      %c0_24 = arith.constant 0 : index
      %26 = vector.load %arg10[%c0_23, %c0_24] : memref<8x128xf32, #tpu.memory_space<vmem>>, vector<8x128xf32>
      %27 = vector.shape_cast %26 : vector<8x128xf32> to vector<1x8x128xf32>
      %c0_25 = arith.constant 0 : index
      %c0_26 = arith.constant 0 : index
      %c0_27 = arith.constant 0 : index
      %28 = vector.load %arg8[%c0_25, %c0_26, %c0_27] : memref<1x8x128xf32, #tpu.memory_space<vmem>>, vector<1x8x128xf32>
      tpu.vector_store %arg8[%c0_25, %c0_26, %c0_27], %27 {strides = array<i32>} : memref<1x8x128xf32, #tpu.memory_space<vmem>>, vector<1x8x128xf32>,
      %c0_28 = arith.constant 0 : index
      %c0_29 = arith.constant 0 : index
      %29 = vector.load %arg11[%c0_28, %c0_29] : memref<8x128xf32, #tpu.memory_space<vmem>>, vector<8x128xf32>
      %30 = vector.shape_cast %29 : vector<8x128xf32> to vector<1x8x128xf32>
      %c0_30 = arith.constant 0 : index
      %c0_31 = arith.constant 0 : index
      %c0_32 = arith.constant 0 : index
      %31 = vector.load %arg9[%c0_30, %c0_31, %c0_32] : memref<1x8x128xf32, #tpu.memory_space<vmem>>, vector<1x8x128xf32>
      tpu.vector_store %arg9[%c0_30, %c0_31, %c0_32], %30 {strides = array<i32>} : memref<1x8x128xf32, #tpu.memory_space<vmem>>, vector<1x8x128xf32>,
    } else {
    }
    return
  }
  func.func @transform_0(%arg0: i32, %arg1: i32) -> (i32, i32) {
    %c1_i32 = arith.constant 1 : i32
    %0 = arith.muli %arg0, %c1_i32 : i32
    %1 = arith.addi %0, %arg1 : i32
    %c0_i32 = arith.constant 0 : i32
    %2 = arith.minsi %1, %c0_i32 : i32
    %c0_i32_0 = arith.constant 0 : i32
    %c0_i32_1 = arith.constant 0 : i32
    return %2, %c0_i32_0 : i32, i32
  }
  func.func @transform_1(%arg0: i32, %arg1: i32) -> (i32, i32) {
    %c1_i32 = arith.constant 1 : i32
    %0 = arith.muli %arg0, %c1_i32 : i32
    %1 = arith.addi %0, %arg1 : i32
    %c0_i32 = arith.constant 0 : i32
    %2 = arith.minsi %1, %c0_i32 : i32
    %c0_i32_0 = arith.constant 0 : i32
    %c0_i32_1 = arith.constant 0 : i32
    return %2, %c0_i32_0 : i32, i32
  }
  func.func @transform_2(%arg0: i32, %arg1: i32) -> (i32, i32) {
    %c1_i32 = arith.constant 1 : i32
    %0 = arith.muli %arg0, %c1_i32 : i32
    %1 = arith.addi %0, %arg1 : i32
    %c0_i32 = arith.constant 0 : i32
    %2 = arith.minsi %1, %c0_i32 : i32
    %c0_i32_0 = arith.constant 0 : i32
    %c0_i32_1 = arith.constant 0 : i32
    return %2, %c0_i32_0 : i32, i32
  }
  func.func @transform_3(%arg0: i32, %arg1: i32) -> (i32, i32) {
    %c1_i32 = arith.constant 1 : i32
    %0 = arith.muli %arg0, %c1_i32 : i32
    %1 = arith.addi %0, %arg1 : i32
    %c0_i32 = arith.constant 0 : i32
    %2 = arith.minsi %1, %c0_i32 : i32
    %c0_i32_0 = arith.constant 0 : i32
    %c0_i32_1 = arith.constant 0 : i32
    return %2, %c0_i32_0 : i32, i32
  }
  func.func @transform_4(%arg0: i32, %arg1: i32) -> (i32, i32) {
    %c1_i32 = arith.constant 1 : i32
    %0 = arith.muli %arg0, %c1_i32 : i32
    %1 = arith.addi %0, %arg1 : i32
    %c0_i32 = arith.constant 0 : i32
    %2 = arith.minsi %1, %c0_i32 : i32
    %c0_i32_0 = arith.constant 0 : i32
    %c0_i32_1 = arith.constant 0 : i32
    return %2, %c0_i32_0 : i32, i32
  }
  func.func @transform_5(%arg0: i32, %arg1: i32) -> (i32, i32) {
    %c1_i32 = arith.constant 1 : i32
    %0 = arith.muli %arg0, %c1_i32 : i32
    %1 = arith.addi %0, %arg1 : i32
    %c0_i32 = arith.constant 0 : i32
    %2 = arith.minsi %1, %c0_i32 : i32
    %c0_i32_0 = arith.constant 0 : i32
    %c0_i32_1 = arith.constant 0 : i32
    return %2, %c0_i32_0 : i32, i32
  }
  func.func @transform_6(%arg0: i32, %arg1: i32) -> (i32, i32, i32) {
    %c0_i32 = arith.constant 0 : i32
    %c0_i32_0 = arith.constant 0 : i32
    %c0_i32_1 = arith.constant 0 : i32
    return %arg0, %c0_i32, %c0_i32_0 : i32, i32, i32
  }
  func.func @transform_7(%arg0: i32, %arg1: i32) -> (i32, i32, i32) {
    %c0_i32 = arith.constant 0 : i32
    %c0_i32_0 = arith.constant 0 : i32
    %c0_i32_1 = arith.constant 0 : i32
    return %arg0, %c0_i32, %c0_i32_0 : i32, i32, i32
  }
}

</mosaic_0001>

<llo_original>
// kernel: tpu_custom_call.1
$region0: #{tpu_custom_call.1}
  #allocation0 [shape = 'u32[]', space=smem, size = 0x4, offset = 0x4, fixed_abs, tag = 'smem constant byte address 0x4 - core index']
  #allocation1 [shape = 'u32[144,128]{1,0:T(1,128)}', space=vmem, size = 0x12000, scoped, tag = 'internal scratch']
  #allocation2 [shape = 'f32[8,128]{1,0:T(8,128)}', space=vmem, size = 0x1000, scoped, tag = 'scratch operand']
  #allocation3 [shape = 'f32[8,128]{1,0:T(8,128)}', space=vmem, size = 0x1000, scoped, tag = 'scratch operand']
  %s0 = inlined_call_operand.hbm [shape: f32[16,128], index: 0, kind: input, shape index: {}]
  %s1 = inlined_call_operand.hbm [shape: f32[16,128], index: 1, kind: input, shape index: {}]
  %s2 = inlined_call_operand.hbm [shape: f32[16,128], index: 2, kind: input, shape index: {}]
  %s3 = inlined_call_operand.hbm [shape: f32[16,128], index: 3, kind: input, shape index: {}]
  %s4 = inlined_call_operand.hbm [shape: f32[16,128], index: 4, kind: input, shape index: {}]
  %s5 = inlined_call_operand.vmem [shape: f32[16,128], index: 5, kind: input, shape index: {}]
  %s6 = inlined_call_operand.hbm [shape: f32[1,8,128], index: 6, kind: output, shape index: {0}]
  %s7 = inlined_call_operand.hbm [shape: f32[1,8,128], index: 7, kind: output, shape index: {1}]
  %8 = xla_tuple %s6, %s7
  %s9 = sld [smem:[#allocation0]]
  $region70: #{tpu_custom_call.1} parent=0
    _
  %s11 = ssub.s32 1, %s9
  %s12 = scalar_select 0, %s11, %s9
  $region1: #{tpu_custom_call.1} parent=0
    #allocation4 [shape = 'u8[8192]{0}', space=vmem, size = 0x2000, scoped, tag = 'input window, operand 0, single buffered']
    #allocation5 [shape = 's32[1]{0}', space=sflag, size = 0x4, scoped, tag = 'scoped memory for tpu_custom_call.1']
    #allocation6 [shape = 's32[1]{0}', space=sflag, size = 0x4, scoped, tag = 'scoped memory for tpu_custom_call.1']
    #allocation7 [shape = 'u8[8192]{0}', space=vmem, size = 0x2000, scoped, tag = 'input window, operand 1, single buffered']
    #allocation8 [shape = 's32[1]{0}', space=sflag, size = 0x4, scoped, tag = 'scoped memory for tpu_custom_call.1']
    #allocation9 [shape = 'u8[8192]{0}', space=vmem, size = 0x2000, scoped, tag = 'input window, operand 2, single buffered']
    #allocation10 [shape = 'u8[8192]{0}', space=vmem, size = 0x2000, scoped, tag = 'input window, operand 3, single buffered']
    #allocation11 [shape = 's32[1]{0}', space=sflag, size = 0x4, scoped, tag = 'scoped memory for tpu_custom_call.1']
    #allocation12 [shape = 'u8[8192]{0}', space=vmem, size = 0x2000, scoped, tag = 'input window, operand 4, single buffered']
    #allocation13 [shape = 'u8[4096]{0}', space=vmem, size = 0x1000, scoped, tag = 'output window, operand 0, single buffered']
    #allocation14 [shape = 'u8[4096]{0}', space=vmem, size = 0x1000, scoped, tag = 'output window, operand 1, single buffered']
    #allocation15 [shape = 's32[1]{0}', space=sflag, size = 0x4, scoped, tag = 'scoped memory for tpu_custom_call.1']
    %13 = vsyncpa [#allocation5], 0
    %14 = vsyncpa [#allocation8], 0
    %15 = vsyncpa [#allocation11], 0
    %16 = vsyncpa [#allocation6], 0
    %17 = vsyncpa [#allocation15], 0
    // Predicated region
    $region2: #{tpu_custom_call.1} parent=1 // pred_check
      _
    $region3: #{tpu_custom_call.1} parent=1 // pred_check_branch
      %19 = sbr.rel (0) target = $region5
    $region4: #{tpu_custom_call.1} parent=1 // pred_region
      %s20 = sadd.s32 0, 0
      %p21 = scmp.lt.s32.totalorder %s20, 0
      %s22 = scalar_select %p21, %s20, 0
      %s23 = smul.u32 2, %s22
      %s25 = ssub.s32 256, 256
      %26 = vsyncadd [#allocation5], %s25
      %s27 = smul.addr %s23, 128
      %s28 = scalar_lea.hbm %s0, %s27
      %s29 = sshll.u32 [#allocation4], 4
      %s30 = int_to_ptr.vmem [resolvable:$true] %s29
      %35 = dma.hbm_to_vmem [thread:$0]  %s28, 256, %s30, [#allocation5], 128, 128, 8
    $region5: #{tpu_custom_call.1} parent=1 // pred_fallthru
      _
    // Predicated region
    $region6: #{tpu_custom_call.1} parent=1 // pred_check
      _
    $region7: #{tpu_custom_call.1} parent=1 // pred_check_branch
      %37 = sbr.rel (0) target = $region9
    $region8: #{tpu_custom_call.1} parent=1 // pred_region
      %s38 = sadd.s32 0, 0
      %p39 = scmp.lt.s32.totalorder %s38, 0
      %s40 = scalar_select %p39, %s38, 0
      %s41 = smul.u32 2, %s40
      %s43 = ssub.s32 256, 256
      %44 = vsyncadd [#allocation8], %s43
      %s45 = smul.addr %s41, 128
      %s46 = scalar_lea.hbm %s1, %s45
      %s47 = sshll.u32 [#allocation7], 4
      %s48 = int_to_ptr.vmem [resolvable:$true] %s47
      %53 = dma.hbm_to_vmem [thread:$0]  %s46, 256, %s48, [#allocation8], 128, 128, 8
    $region9: #{tpu_custom_call.1} parent=1 // pred_fallthru
      _
    // Predicated region
    $region10: #{tpu_custom_call.1} parent=1 // pred_check
      _
    $region11: #{tpu_custom_call.1} parent=1 // pred_check_branch
      %55 = sbr.rel (0) target = $region13
    $region12: #{tpu_custom_call.1} parent=1 // pred_region
      %s56 = sadd.s32 0, 0
      %p57 = scmp.lt.s32.totalorder %s56, 0
      %s58 = scalar_select %p57, %s56, 0
      %s59 = smul.u32 2, %s58
      %s61 = ssub.s32 256, 256
      %62 = vsyncadd [#allocation8], %s61
      %s63 = smul.addr %s59, 128
      %s64 = scalar_lea.hbm %s2, %s63
      %s65 = sshll.u32 [#allocation9], 4
      %s66 = int_to_ptr.vmem [resolvable:$true] %s65
      %71 = dma.hbm_to_vmem [thread:$0]  %s64, 256, %s66, [#allocation8], 128, 128, 8
    $region13: #{tpu_custom_call.1} parent=1 // pred_fallthru
      _
    // Predicated region
    $region14: #{tpu_custom_call.1} parent=1 // pred_check
      _
    $region15: #{tpu_custom_call.1} parent=1 // pred_check_branch
      %73 = sbr.rel (0) target = $region17
    $region16: #{tpu_custom_call.1} parent=1 // pred_region
      %s74 = sadd.s32 0, 0
      %p75 = scmp.lt.s32.totalorder %s74, 0
      %s76 = scalar_select %p75, %s74, 0
      %s77 = smul.u32 2, %s76
      %s79 = ssub.s32 256, 256
      %80 = vsyncadd [#allocation11], %s79
      %s81 = smul.addr %s77, 128
      %s82 = scalar_lea.hbm %s3, %s81
      %s83 = sshll.u32 [#allocation10], 4
      %s84 = int_to_ptr.vmem [resolvable:$true] %s83
      %89 = dma.hbm_to_vmem [thread:$0]  %s82, 256, %s84, [#allocation11], 128, 128, 8
    $region17: #{tpu_custom_call.1} parent=1 // pred_fallthru
      _
    // Predicated region
    $region18: #{tpu_custom_call.1} parent=1 // pred_check
      _
    $region19: #{tpu_custom_call.1} parent=1 // pred_check_branch
      %91 = sbr.rel (0) target = $region21
    $region20: #{tpu_custom_call.1} parent=1 // pred_region
      %s92 = sadd.s32 0, 0
      %p93 = scmp.lt.s32.totalorder %s92, 0
      %s94 = scalar_select %p93, %s92, 0
      %s95 = smul.u32 2, %s94
      %s97 = ssub.s32 256, 256
      %98 = vsyncadd [#allocation11], %s97
      %s99 = smul.addr %s95, 128
      %s100 = scalar_lea.hbm %s4, %s99
      %s101 = sshll.u32 [#allocation12], 4
      %s102 = int_to_ptr.vmem [resolvable:$true] %s101
      %107 = dma.hbm_to_vmem [thread:$0]  %s100, 256, %s102, [#allocation11], 128, 128, 8
    $region21: #{tpu_custom_call.1} parent=1 // pred_fallthru
      _
    // Predicated region
    $region22: #{tpu_custom_call.1} parent=1 // pred_check
      _
    $region23: #{tpu_custom_call.1} parent=1 // pred_check_branch
      %109 = sbr.rel (0) target = $region25
    $region24: #{tpu_custom_call.1} parent=1 // pred_region
      %s110 = sadd.s32 0, 0
      %p111 = scmp.lt.s32.totalorder %s110, 0
      %s112 = scalar_select %p111, %s110, 0
      %s113 = smul.u32 2, %s112
      %p114 = scmp.lt.s32.totalorder %s113, 1
      %s115 = scalar_select %p114, %s113, 1
      %s116 = smul.addr %s115, 8
      %s117 = scalar_lea.vmem %s5, %s116
      %s118 = sadd.s32 0, 0
      %p119 = scmp.lt.s32.totalorder %s118, 0
      %s120 = scalar_select %p119, %s118, 0
      %s121 = smul.u32 2, %s120
    $region25: #{tpu_custom_call.1} parent=1 // pred_fallthru
      _
    // Predicated region
    $region26: #{tpu_custom_call.1} parent=1 // pred_check
      _
    $region27: #{tpu_custom_call.1} parent=1 // pred_check_branch
      %123 = sbr.rel (0) target = $region29
    $region28: #{tpu_custom_call.1} parent=1 // pred_region
      %124 = dma.done [#allocation5], 256
    $region29: #{tpu_custom_call.1} parent=1 // pred_fallthru
      _
    // Predicated region
    $region30: #{tpu_custom_call.1} parent=1 // pred_check
      _
    $region31: #{tpu_custom_call.1} parent=1 // pred_check_branch
      %126 = sbr.rel (0) target = $region33
    $region32: #{tpu_custom_call.1} parent=1 // pred_region
      %127 = dma.done [#allocation8], 256
    $region33: #{tpu_custom_call.1} parent=1 // pred_fallthru
      _
    // Predicated region
    $region34: #{tpu_custom_call.1} parent=1 // pred_check
      _
    $region35: #{tpu_custom_call.1} parent=1 // pred_check_branch
      %129 = sbr.rel (0) target = $region37
    $region36: #{tpu_custom_call.1} parent=1 // pred_region
      %130 = dma.done [#allocation8], 256
    $region37: #{tpu_custom_call.1} parent=1 // pred_fallthru
      _
    // Predicated region
    $region38: #{tpu_custom_call.1} parent=1 // pred_check
      _
    $region39: #{tpu_custom_call.1} parent=1 // pred_check_branch
      %132 = sbr.rel (0) target = $region41
    $region40: #{tpu_custom_call.1} parent=1 // pred_region
      %133 = dma.done [#allocation11], 256
    $region41: #{tpu_custom_call.1} parent=1 // pred_fallthru
      _
    // Predicated region
    $region42: #{tpu_custom_call.1} parent=1 // pred_check
      _
    $region43: #{tpu_custom_call.1} parent=1 // pred_check_branch
      %135 = sbr.rel (0) target = $region45
    $region44: #{tpu_custom_call.1} parent=1 // pred_region
      %136 = dma.done [#allocation11], 256
    $region45: #{tpu_custom_call.1} parent=1 // pred_fallthru
      _
    %s137 = sadd.s32 0, 0
    %p138 = scmp.lt.s32.totalorder %s137, 0
    %s139 = scalar_select %p138, %s137, 0
    %s140 = smul.u32 2, %s139
    %p141 = scmp.lt.s32.totalorder %s140, 1
    %s142 = scalar_select %p141, %s140, 1
    %s143 = smul.addr %s142, 8
    %s144 = scalar_lea.vmem %s5, %s143
    %s145 = sadd.s32 0, 0
    %p146 = scmp.lt.s32.totalorder %s145, 0
    %s147 = scalar_select %p146, %s145, 0
    %s148 = smul.u32 2, %s147
    %s149 = sadd.s32 0, 0
    %p150 = scmp.lt.s32.totalorder %s149, 0
    %s151 = scalar_select %p150, %s149, 0
    %s152 = smul.u32 2, %s151
    %s153 = sadd.s32 0, 0
    %p154 = scmp.lt.s32.totalorder %s153, 0
    %s155 = scalar_select %p154, %s153, 0
    %s156 = smul.u32 2, %s155
    %s157 = sadd.s32 0, 0
    %p158 = scmp.lt.s32.totalorder %s157, 0
    %s159 = scalar_select %p158, %s157, 0
    %s160 = smul.u32 2, %s159
    %s161 = sadd.s32 0, 0
    %p162 = scmp.lt.s32.totalorder %s161, 0
    %s163 = scalar_select %p162, %s161, 0
    %s164 = smul.u32 2, %s163
    %s165 = sadd.s32 0, 0
    %p166 = scmp.lt.s32.totalorder %s165, 0
    %s167 = scalar_select %p166, %s165, 0
    %s168 = smul.u32 2, %s167
    %p169 = scmp.lt.s32.totalorder %s168, 1
    %s170 = scalar_select %p169, %s168, 1
    %s171 = smul.addr %s170, 8
    %s172 = scalar_lea.vmem %s5, %s171
    %s173 = sadd.s32 0, 0
    %p174 = scmp.lt.s32.totalorder %s173, 0
    %s175 = scalar_select %p174, %s173, 0
    %s176 = smul.u32 2, %s175
    %p177 = scmp.eq.s32.totalorder 0, 0
    // Predicated region
    $region46: #{tpu_custom_call.1} parent=1 // pred_check
      %p178 = pneg %p177
    $region47: #{tpu_custom_call.1} parent=1 // pred_check_branch
      %180 = sbr.rel (%p178) target = $region49
    $region48: #{tpu_custom_call.1} parent=1 // pred_region
      %181 = vst [vmem:[#allocation2] sm:$0xff] 0.0
      %182 = vst [vmem:[#allocation3] sm:$0xff] 0.0
    $region49: #{tpu_custom_call.1} parent=1 // pred_fallthru
      _
    %v183 = vld [vmem:[#allocation4] sm:$0xff]
    %v184 = vld [vmem:[#allocation4 + $0x8] sm:$0xff]
    %v185 = vld [vmem:[#allocation7] sm:$0xff]
    %v186 = vld [vmem:[#allocation7 + $0x8] sm:$0xff]
    %v187 = vmul.f32 %v183, %v185
    %v188 = vmul.f32 %v184, %v186
    %v189 = vld [vmem:[#allocation9] sm:$0xff]
    %v190 = vld [vmem:[#allocation9 + $0x8] sm:$0xff]
    %v191 = vmul.f32 %v187, %v189
    %v192 = vmul.f32 %v188, %v190
    %v193 = vld [vmem:[#allocation2] sm:$0xff]
    %v194 = vadd.f32 %v191, %v192
    %v195 = vadd.f32 %v193, %v194
    %196 = vst [vmem:[#allocation2] sm:$0xff] %v195
    %v197 = vld [vmem:[#allocation10] sm:$0xff]
    %v198 = vld [vmem:[#allocation10 + $0x8] sm:$0xff]
    %v199 = vld [vmem:[#allocation12] sm:$0xff]
    %v200 = vld [vmem:[#allocation12 + $0x8] sm:$0xff]
    %v201 = vmul.f32 %v197, %v199
    %v202 = vmul.f32 %v198, %v200
    %v203 = vld [vmem:[%s172] sm:$0xff]
    %v204 = vld [vmem:[%s172 + $0x8] sm:$0xff]
    %v205 = vmul.f32 %v201, %v203
    %v206 = vmul.f32 %v202, %v204
    %v207 = vld [vmem:[#allocation3] sm:$0xff]
    %v208 = vadd.f32 %v205, %v206
    %v209 = vadd.f32 %v207, %v208
    %210 = vst [vmem:[#allocation3] sm:$0xff] %v209
    // Predicated region
    $region50: #{tpu_custom_call.1} parent=1 // pred_check
      %p211 = pneg %p177
    $region51: #{tpu_custom_call.1} parent=1 // pred_check_branch
      %213 = sbr.rel (%p211) target = $region53
    $region52: #{tpu_custom_call.1} parent=1 // pred_region
      %v214 = vld [vmem:[#allocation2] sm:$0xff]
      %215 = vst [vmem:[#allocation13] sm:$0xff] %v214
      %v216 = vld [vmem:[#allocation3] sm:$0xff]
      %217 = vst [vmem:[#allocation14] sm:$0xff] %v216
    $region53: #{tpu_custom_call.1} parent=1 // pred_fallthru
      _
    // Predicated region
    $region54: #{tpu_custom_call.1} parent=1 // pred_check
      _
    $region55: #{tpu_custom_call.1} parent=1 // pred_check_branch
      %219 = sbr.rel (0) target = $region57
    $region56: #{tpu_custom_call.1} parent=1 // pred_region
      %s221 = ssub.s32 128, 128
      %222 = vsyncadd [#allocation6], %s221
      %s224 = sshll.u32 [#allocation13], 4
      %s225 = int_to_ptr.vmem [resolvable:$true] %s224
      %227 = dma.vmem_to_hbm [thread:$0]  %s225, 128, %s6, [#allocation6]
    $region57: #{tpu_custom_call.1} parent=1 // pred_fallthru
      _
    // Predicated region
    $region58: #{tpu_custom_call.1} parent=1 // pred_check
      _
    $region59: #{tpu_custom_call.1} parent=1 // pred_check_branch
      %229 = sbr.rel (0) target = $region61
    $region60: #{tpu_custom_call.1} parent=1 // pred_region
      %s231 = ssub.s32 128, 128
      %232 = vsyncadd [#allocation15], %s231
      %s234 = sshll.u32 [#allocation14], 4
      %s235 = int_to_ptr.vmem [resolvable:$true] %s234
      %237 = dma.vmem_to_hbm [thread:$0]  %s235, 128, %s7, [#allocation15]
    $region61: #{tpu_custom_call.1} parent=1 // pred_fallthru
      _
    // Predicated region
    $region62: #{tpu_custom_call.1} parent=1 // pred_check
      _
    $region63: #{tpu_custom_call.1} parent=1 // pred_check_branch
      %239 = sbr.rel (0) target = $region65
    $region64: #{tpu_custom_call.1} parent=1 // pred_region
      %240 = dma.done [#allocation6], 128
    $region65: #{tpu_custom_call.1} parent=1 // pred_fallthru
      _
    // Predicated region
    $region66: #{tpu_custom_call.1} parent=1 // pred_check
      _
    $region67: #{tpu_custom_call.1} parent=1 // pred_check_branch
      %242 = sbr.rel (0) target = $region69
    $region68: #{tpu_custom_call.1} parent=1 // pred_region
      %243 = dma.done [#allocation15], 128
    $region69: #{tpu_custom_call.1} parent=1 // pred_fallthru
      _
    %244 = vsyncpa [#allocation5], 1
    %245 = vsyncpa [#allocation8], 1
    %246 = vsyncpa [#allocation11], 1
    %247 = vsyncpa [#allocation6], 1
    %248 = vsyncpa [#allocation15], 1

</llo_original>
